<compile_context>
chip_gen: v6e
topology: v6e:2x2x1
jax: 0.10.0
libtpu: 0.0.40
codegen_flags: <defaults>
</compile_context>

<pallas_src>
import functools

import jax
import jax.numpy as jnp
from jax.experimental import pallas as pl
from jax.experimental.pallas import tpu as pltpu


def _round_up(v, m):
    return (v + m - 1) // m * m


def _fused_graphsage_kernel(adj_ref, x_ref, invdeg_ref, w_ref, b_ref, o_ref,
                            h_scr, agg_scr, feat_scr,
                            *, num_layers, out_channels, fp):
    l = pl.program_id(0)            # layer index (sequential)
    k = pl.program_id(1)            # adjacency column tile (reduction axis)
    kt = pl.num_programs(1)
    tk = adj_ref.shape[1]           # static column-tile width

    # Load the (padded, bf16) input features into the resident h buffer once.
    @pl.when(jnp.logical_and(l == 0, k == 0))
    def _init_h():
        h_scr[...] = x_ref[...]

    # Zero the f32 aggregation accumulator at the start of every layer.
    @pl.when(k == 0)
    def _zero_acc():
        agg_scr[...] = jnp.zeros_like(agg_scr)

    # Accumulate neighbor sums for this column tile:  agg += adj_tile @ h_tile
    start = k * tk
    if tk % 128 == 0:
        start = pl.multiple_of(start, 128)
    h_tile = h_scr[pl.ds(start, tk), :]
    agg_scr[...] += jnp.dot(adj_ref[...], h_tile,
                            preferred_element_type=jnp.float32)

    # Finish the layer once all adjacency tiles have been consumed.
    @pl.when(k == kt - 1)
    def _finish_layer():
        # Mean aggregation: scale row sums by 1/deg (f32), then bf16 for MXU.
        agg = (agg_scr[...] * invdeg_ref[...]).astype(jnp.bfloat16)
        # Merged matmul:  [agg | h] @ [W_l ; W_r]  (single MXU pass, K = 2*fp).
        feat_scr[:, :fp] = agg
        feat_scr[:, fp:] = h_scr[...]
        out = jnp.dot(feat_scr[...], w_ref[0],
                      preferred_element_type=jnp.float32) + b_ref[0]

        @pl.when(l < num_layers - 1)
        def _hidden():
            # ReLU; dropout is identity in eval mode. Padded lanes stay 0.
            h_scr[...] = jnp.maximum(out, 0.0).astype(jnp.bfloat16)

        @pl.when(l == num_layers - 1)
        def _final():
            # log_softmax over the real (unpadded) class lanes only.
            col = jax.lax.broadcasted_iota(jnp.int32, out.shape, 1)
            valid = col < out_channels
            masked = jnp.where(valid, out, -1e30)
            m = jnp.max(masked, axis=-1, keepdims=True)
            s = masked - m
            denom = jnp.sum(jnp.where(valid, jnp.exp(s), 0.0),
                            axis=-1, keepdims=True)
            o_ref[...] = jnp.where(valid, s - jnp.log(denom), 0.0)


def graphsage_forward(x, adj, params):
    """Full GraphSAGE forward (eval mode), fused into a single pallas_call."""
    n, in_ch = x.shape
    num_layers = len(params)
    out_ch = params[-1][0].shape[1]
    dims = [in_ch] + [w_l.shape[1] for (w_l, _, _) in params]
    fp = _round_up(max(dims), 128)          # lane-dense padded feature width

    # Row padding (sublane) and adjacency-column tiling for the reduction.
    n_pad = _round_up(n, 8)
    if n_pad <= 1024:
        tk = n_pad                          # single K tile: block == full dim
    else:
        tk = 512                            # stream adj in 512-column tiles
        n_pad = _round_up(n, tk)
    kt = n_pad // tk

    # Pack per-layer weights into one merged, zero-padded bf16 tensor:
    #   W_cat[l] = [[W_l], [W_r]]  -> (2*fp, fp);  b_cat[l] -> (1, fp) f32.
    w_cat, b_cat = [], []
    for (w_l, w_r, b) in params:
        d_in, d_out = w_l.shape
        wl_p = jnp.zeros((fp, fp), jnp.float32).at[:d_in, :d_out].set(w_l)
        wr_p = jnp.zeros((fp, fp), jnp.float32).at[:d_in, :d_out].set(w_r)
        w_cat.append(jnp.concatenate([wl_p, wr_p], axis=0))
        b_cat.append(jnp.zeros((1, fp), jnp.float32).at[:, :d_out].set(b))
    w_cat = jnp.stack(w_cat).astype(jnp.bfloat16)       # [L, 2*fp, fp]
    b_cat = jnp.stack(b_cat)                            # [L, 1, fp]  f32

    # Binary adjacency stays exact in bf16; mean normalization happens inside
    # the kernel via a f32 inv_deg vector (no second NxN f32 array in HBM).
    adj_p = jnp.zeros((n_pad, n_pad), jnp.bfloat16).at[:n, :n].set(
        adj.astype(jnp.bfloat16))
    x_p = jnp.zeros((n_pad, fp), jnp.bfloat16).at[:n, :in_ch].set(
        x.astype(jnp.bfloat16))
    deg = jnp.sum(adj, axis=-1, keepdims=True)
    inv_deg = jnp.zeros((n_pad, 1), jnp.float32).at[:n].set(
        1.0 / jnp.maximum(deg, 1.0))

    kernel = functools.partial(_fused_graphsage_kernel,
                               num_layers=num_layers,
                               out_channels=out_ch, fp=fp)

    out = pl.pallas_call(
        kernel,
        out_shape=jax.ShapeDtypeStruct((n_pad, fp), jnp.float32),
        grid_spec=pltpu.PrefetchScalarGridSpec(
            num_scalar_prefetch=0,
            grid=(num_layers, kt),
            in_specs=[
                pl.BlockSpec((n_pad, tk), lambda l, k: (0, k)),          # adj
                pl.BlockSpec((n_pad, fp), lambda l, k: (0, 0)),          # x
                pl.BlockSpec((n_pad, 1), lambda l, k: (0, 0)),           # 1/deg
                pl.BlockSpec((1, 2 * fp, fp), lambda l, k: (l, 0, 0)),   # W_cat
                pl.BlockSpec((1, 1, fp), lambda l, k: (l, 0, 0)),        # b_cat
            ],
            out_specs=pl.BlockSpec((n_pad, fp), lambda l, k: (0, 0)),
            scratch_shapes=[
                pltpu.VMEM((n_pad, fp), jnp.bfloat16),        # resident h
                pltpu.VMEM((n_pad, fp), jnp.float32),         # f32 agg accum
                pltpu.VMEM((n_pad, 2 * fp), jnp.bfloat16),    # merged [agg|h]
            ]),
        compiler_params=pltpu.CompilerParams(
            dimension_semantics=("arbitrary", "arbitrary")),
    )(adj_p, x_p, inv_deg, w_cat, b_cat)

    return out[:n, :out_ch]


def init_graphsage_params(key, in_channels, hidden_channels, out_channels,
                          num_layers):
    """Deterministic parameter init matching the module's layer structure."""
    dims = [in_channels] + [hidden_channels] * (num_layers - 1) + [out_channels]
    params = []
    for li in range(num_layers):
        d_in, d_out = dims[li], dims[li + 1]
        key, k1, k2, k3 = jax.random.split(key, 4)
        scale = 1.0 / jnp.sqrt(jnp.float32(d_in))
        w_l = jax.random.uniform(k1, (d_in, d_out), jnp.float32, -scale, scale)
        w_r = jax.random.uniform(k2, (d_in, d_out), jnp.float32, -scale, scale)
        b = jax.random.uniform(k3, (1, d_out), jnp.float32, -scale, scale)
        params.append((w_l, w_r, b))
    return params


def _reference_forward(x, adj, params):
    """Pure-JAX f32 reference (same semantics as the PyTorch module, eval)."""
    deg = jnp.maximum(jnp.sum(adj, axis=-1, keepdims=True), 1.0)
    adj_n = adj / deg
    h = x
    for li, (w_l, w_r, b) in enumerate(params):
        out = (adj_n @ h) @ w_l + h @ w_r + b
        if li < len(params) - 1:
            h = jax.nn.relu(out)
        else:
            h = jax.nn.log_softmax(out, axis=-1)
    return h


if __name__ == "__main__":
    # Small deterministic example.
    N = 64                # number of nodes
    IN_CH = 16
    HIDDEN_CH = 32
    OUT_CH = 8
    NUM_LAYERS = 3
    DROPOUT = 0.5         # unused in eval mode

    key = jax.random.PRNGKey(0)
    key, kx, ka = jax.random.split(key, 3)

    x = jax.random.normal(kx, (N, IN_CH), dtype=jnp.float32)
    # Random binary adjacency (adj[i, j] = 1 if j is a neighbor of i).
    adj = (jax.random.uniform(ka, (N, N)) < 0.1).astype(jnp.float32)

    params = init_graphsage_params(key, IN_CH, HIDDEN_CH, OUT_CH, NUM_LAYERS)

    fwd = jax.jit(graphsage_forward)
    out = jax.block_until_ready(fwd(x, adj, params))

    assert out.shape == (N, OUT_CH)
    assert bool(jnp.all(jnp.isfinite(out)))
    # log_softmax rows should sum (in prob space) to ~1.
    assert jnp.allclose(jnp.sum(jnp.exp(out), axis=-1), 1.0, atol=1e-4)
    # Loose check vs. a pure-f32 reference (kernel uses bf16 MXU inputs).
    ref = _reference_forward(x, adj, params)
    max_err = float(jnp.max(jnp.abs(out - ref)))
    assert max_err < 1e-1, max_err

    print("KERNEL_OK")
</pallas_src>

<mosaic_0001>
module attributes {stable_mosaic.version = 11 : i64} {
  func.func @_fused_graphsage_kernel(%arg0: i32, %arg1: i32, %arg2: memref<64x64xbf16, #tpu.memory_space<vmem>>, %arg3: memref<64x128xbf16, #tpu.memory_space<vmem>>, %arg4: memref<64x1xf32, #tpu.memory_space<vmem>>, %arg5: memref<1x256x128xbf16, #tpu.memory_space<vmem>>, %arg6: memref<1x1x128xf32, #tpu.memory_space<vmem>>, %arg7: memref<64x128xf32, #tpu.memory_space<vmem>>, %arg8: memref<64x128xbf16, #tpu.memory_space<vmem>>, %arg9: memref<64x128xf32, #tpu.memory_space<vmem>>, %arg10: memref<64x256xbf16, #tpu.memory_space<vmem>>) attributes {dimension_semantics = [#tpu.dimension_semantics<arbitrary>, #tpu.dimension_semantics<arbitrary>], iteration_bounds = array<i64: 3, 1>, scalar_prefetch = 0 : i64, scratch_operands = 3 : i64, tpu.core_type = #tpu.core_type<tc>, window_params = [{transform_indices = @transform_0, window_bounds = array<i64: 64, 64>}, {pipeline_mode = #tpu.pipeline_mode<synchronous>, transform_indices = @transform_1, window_bounds = array<i64: 64, 128>}, {pipeline_mode = #tpu.pipeline_mode<synchronous>, transform_indices = @transform_2, window_bounds = array<i64: 64, 1>}, {transform_indices = @transform_3, window_bounds = array<i64: 1, 256, 128>}, {transform_indices = @transform_4, window_bounds = array<i64: 1, 1, 128>}, {pipeline_mode = #tpu.pipeline_mode<synchronous>, transform_indices = @transform_5, window_bounds = array<i64: 64, 128>}]} {
    %c0_i32 = arith.constant 0 : i32
    %0 = arith.cmpi eq, %arg0, %c0_i32 : i32
    %c0_i32_0 = arith.constant 0 : i32
    %1 = arith.cmpi eq, %arg1, %c0_i32_0 : i32
    %2 = arith.andi %0, %1 : i1
    %3 = arith.extui %2 : i1 to i32
    %c0_i32_1 = arith.constant 0 : i32
    %4 = arith.cmpi ne, %3, %c0_i32_1 : i32
    scf.if %4 {
      %c0_12 = arith.constant 0 : index
      %c0_13 = arith.constant 0 : index
      %19 = vector.load %arg3[%c0_12, %c0_13] : memref<64x128xbf16, #tpu.memory_space<vmem>>, vector<64x128xbf16>
      %c0_14 = arith.constant 0 : index
      %c0_15 = arith.constant 0 : index
      %20 = vector.load %arg8[%c0_14, %c0_15] : memref<64x128xbf16, #tpu.memory_space<vmem>>, vector<64x128xbf16>
      tpu.vector_store %arg8[%c0_14, %c0_15], %19 {strides = array<i32>} : memref<64x128xbf16, #tpu.memory_space<vmem>>, vector<64x128xbf16>,
    } else {
    }
    %c0_i32_2 = arith.constant 0 : i32
    %5 = arith.cmpi eq, %arg1, %c0_i32_2 : i32
    %6 = arith.extui %5 : i1 to i32
    %c0_i32_3 = arith.constant 0 : i32
    %7 = arith.cmpi ne, %6, %c0_i32_3 : i32
    scf.if %7 {
      %cst_12 = arith.constant 0.000000e+00 : f32
      %19 = vector.broadcast %cst_12 : f32 to vector<64x128xf32>
      %c0_13 = arith.constant 0 : index
      %c0_14 = arith.constant 0 : index
      %20 = vector.load %arg9[%c0_13, %c0_14] : memref<64x128xf32, #tpu.memory_space<vmem>>, vector<64x128xf32>
      tpu.vector_store %arg9[%c0_13, %c0_14], %19 {strides = array<i32>} : memref<64x128xf32, #tpu.memory_space<vmem>>, vector<64x128xf32>,
    } else {
    }
    %c64_i32 = arith.constant 64 : i32
    %8 = arith.muli %arg1, %c64_i32 : i32
    %9 = arith.index_cast %8 : i32 to index
    %c0 = arith.constant 0 : index
    %10 = vector.load %arg8[%9, %c0] : memref<64x128xbf16, #tpu.memory_space<vmem>>, vector<64x128xbf16>
    %c0_4 = arith.constant 0 : index
    %c0_5 = arith.constant 0 : index
    %11 = vector.load %arg9[%c0_4, %c0_5] : memref<64x128xf32, #tpu.memory_space<vmem>>, vector<64x128xf32>
    %c0_6 = arith.constant 0 : index
    %c0_7 = arith.constant 0 : index
    %12 = vector.load %arg2[%c0_6, %c0_7] : memref<64x64xbf16, #tpu.memory_space<vmem>>, vector<64x64xbf16>
    %cst = arith.constant dense<0.000000e+00> : vector<64x128xf32>
    %13 = tpu.matmul %12, %10, %cst {dimension_numbers = #tpu.dot_dimension_numbers<[1], [0], [0], [1], [0, 0, 1, 1], [], []>} : vector<64x64xbf16>, vector<64x128xbf16>, vector<64x128xf32> -> vector<64x128xf32>
    %14 = arith.addf %11, %13 : vector<64x128xf32>
    %c0_8 = arith.constant 0 : index
    %c0_9 = arith.constant 0 : index
    %15 = vector.load %arg9[%c0_8, %c0_9] : memref<64x128xf32, #tpu.memory_space<vmem>>, vector<64x128xf32>
    tpu.vector_store %arg9[%c0_8, %c0_9], %14 {strides = array<i32>} : memref<64x128xf32, #tpu.memory_space<vmem>>, vector<64x128xf32>,
    %c0_i32_10 = arith.constant 0 : i32
    %16 = arith.cmpi eq, %arg1, %c0_i32_10 : i32
    %17 = arith.extui %16 : i1 to i32
    %c0_i32_11 = arith.constant 0 : i32
    %18 = arith.cmpi ne, %17, %c0_i32_11 : i32
    scf.if %18 {
      %c0_12 = arith.constant 0 : index
      %c0_13 = arith.constant 0 : index
      %19 = vector.load %arg9[%c0_12, %c0_13] : memref<64x128xf32, #tpu.memory_space<vmem>>, vector<64x128xf32>
      %c0_14 = arith.constant 0 : index
      %c0_15 = arith.constant 0 : index
      %20 = vector.load %arg4[%c0_14, %c0_15] : memref<64x1xf32, #tpu.memory_space<vmem>>, vector<64x1xf32>
      %21 = vector.broadcast %20 : vector<64x1xf32> to vector<64x128xf32>
      %22 = arith.mulf %19, %21 : vector<64x128xf32>
      %23 = arith.truncf %22 : vector<64x128xf32> to vector<64x128xbf16>
      %c0_16 = arith.constant 0 : index
      %c0_17 = arith.constant 0 : index
      %24 = vector.load %arg10[%c0_16, %c0_17] : memref<64x256xbf16, #tpu.memory_space<vmem>>, vector<64x128xbf16>
      tpu.vector_store %arg10[%c0_16, %c0_17], %23 {strides = array<i32>} : memref<64x256xbf16, #tpu.memory_space<vmem>>, vector<64x128xbf16>,
      %c0_18 = arith.constant 0 : index
      %c0_19 = arith.constant 0 : index
      %25 = vector.load %arg8[%c0_18, %c0_19] : memref<64x128xbf16, #tpu.memory_space<vmem>>, vector<64x128xbf16>
      %c0_20 = arith.constant 0 : index
      %c128 = arith.constant 128 : index
      %26 = vector.load %arg10[%c0_20, %c128] : memref<64x256xbf16, #tpu.memory_space<vmem>>, vector<64x128xbf16>
      tpu.vector_store %arg10[%c0_20, %c128], %25 {strides = array<i32>} : memref<64x256xbf16, #tpu.memory_space<vmem>>, vector<64x128xbf16>,
      %c0_21 = arith.constant 0 : index
      %c0_22 = arith.constant 0 : index
      %27 = vector.load %arg10[%c0_21, %c0_22] : memref<64x256xbf16, #tpu.memory_space<vmem>>, vector<64x256xbf16>
      %c0_23 = arith.constant 0 : index
      %c0_24 = arith.constant 0 : index
      %c0_25 = arith.constant 0 : index
      %28 = vector.load %arg5[%c0_23, %c0_24, %c0_25] : memref<1x256x128xbf16, #tpu.memory_space<vmem>>, vector<1x256x128xbf16>
      %29 = vector.shape_cast %28 : vector<1x256x128xbf16> to vector<256x128xbf16>
      %cst_26 = arith.constant dense<0.000000e+00> : vector<64x128xf32>
      %30 = tpu.matmul %27, %29, %cst_26 {dimension_numbers = #tpu.dot_dimension_numbers<[1], [0], [0], [1], [0, 0, 1, 1], [], []>} : vector<64x256xbf16>, vector<256x128xbf16>, vector<64x128xf32> -> vector<64x128xf32>
      %c0_27 = arith.constant 0 : index
      %c0_28 = arith.constant 0 : index
      %c0_29 = arith.constant 0 : index
      %31 = vector.load %arg6[%c0_27, %c0_28, %c0_29] : memref<1x1x128xf32, #tpu.memory_space<vmem>>, vector<1x1x128xf32>
      %32 = vector.shape_cast %31 : vector<1x1x128xf32> to vector<1x128xf32>
      %33 = vector.broadcast %32 : vector<1x128xf32> to vector<64x128xf32>
      %34 = arith.addf %30, %33 : vector<64x128xf32>
      %c2_i32 = arith.constant 2 : i32
      %35 = arith.cmpi slt, %arg0, %c2_i32 : i32
      %36 = arith.extui %35 : i1 to i32
      %c0_i32_30 = arith.constant 0 : i32
      %37 = arith.cmpi ne, %36, %c0_i32_30 : i32
      scf.if %37 {
        %cst_33 = arith.constant 0.000000e+00 : f32
        %41 = vector.broadcast %cst_33 : f32 to vector<64x128xf32>
        %42 = arith.maximumf %34, %41 : vector<64x128xf32>
        %43 = arith.truncf %42 : vector<64x128xf32> to vector<64x128xbf16>
        %c0_34 = arith.constant 0 : index
        %c0_35 = arith.constant 0 : index
        %44 = vector.load %arg8[%c0_34, %c0_35] : memref<64x128xbf16, #tpu.memory_space<vmem>>, vector<64x128xbf16>
        tpu.vector_store %arg8[%c0_34, %c0_35], %43 {strides = array<i32>} : memref<64x128xbf16, #tpu.memory_space<vmem>>, vector<64x128xbf16>,
      } else {
      }
      %c2_i32_31 = arith.constant 2 : i32
      %38 = arith.cmpi eq, %arg0, %c2_i32_31 : i32
      %39 = arith.extui %38 : i1 to i32
      %c0_i32_32 = arith.constant 0 : i32
      %40 = arith.cmpi ne, %39, %c0_i32_32 : i32
      scf.if %40 {
        %41 = tpu.iota {dimensions = array<i32: 1>} : vector<64x128xi32>
        %c8_i32 = arith.constant 8 : i32
        %42 = vector.broadcast %c8_i32 : i32 to vector<64x128xi32>
        %43 = arith.cmpi slt, %41, %42 : vector<64x128xi32>
        %cst_33 = arith.constant -1.000000e+30 : f32
        %44 = vector.broadcast %cst_33 : f32 to vector<64x128xf32>
        %45 = arith.select %43, %34, %44 : vector<64x128xi1>, vector<64x128xf32>
        %cst_34 = arith.constant dense<0xFF800000> : vector<64xf32>
        %46 = vector.multi_reduction <maximumf>, %45, %cst_34 [1] : vector<64x128xf32> to vector<64xf32>
        %47 = vector.shape_cast %46 : vector<64xf32> to vector<64x1xf32>
        %48 = vector.broadcast %47 : vector<64x1xf32> to vector<64x128xf32>
        %49 = arith.subf %45, %48 : vector<64x128xf32>
        %50 = math.exp %49 : vector<64x128xf32>
        %cst_35 = arith.constant 0.000000e+00 : f32
        %51 = vector.broadcast %cst_35 : f32 to vector<64x128xf32>
        %52 = arith.select %43, %50, %51 : vector<64x128xi1>, vector<64x128xf32>
        %cst_36 = arith.constant dense<0.000000e+00> : vector<64xf32>
        %53 = vector.multi_reduction <add>, %52, %cst_36 [1] : vector<64x128xf32> to vector<64xf32>
        %54 = vector.shape_cast %53 : vector<64xf32> to vector<64x1xf32>
        %55 = math.log %54 : vector<64x1xf32>
        %56 = vector.broadcast %55 : vector<64x1xf32> to vector<64x128xf32>
        %57 = arith.subf %49, %56 : vector<64x128xf32>
        %cst_37 = arith.constant 0.000000e+00 : f32
        %58 = vector.broadcast %cst_37 : f32 to vector<64x128xf32>
        %59 = arith.select %43, %57, %58 : vector<64x128xi1>, vector<64x128xf32>
        %c0_38 = arith.constant 0 : index
        %c0_39 = arith.constant 0 : index
        %60 = vector.load %arg7[%c0_38, %c0_39] : memref<64x128xf32, #tpu.memory_space<vmem>>, vector<64x128xf32>
        tpu.vector_store %arg7[%c0_38, %c0_39], %59 {strides = array<i32>} : memref<64x128xf32, #tpu.memory_space<vmem>>, vector<64x128xf32>,
      } else {
      }
    } else {
    }
    return
  }
  func.func @transform_0(%arg0: i32, %arg1: i32) -> (i32, i32) {
    %c0_i32 = arith.constant 0 : i32
    %c0_i32_0 = arith.constant 0 : i32
    return %c0_i32, %arg1 : i32, i32
  }
  func.func @transform_1(%arg0: i32, %arg1: i32) -> (i32, i32) {
    %c0_i32 = arith.constant 0 : i32
    %c0_i32_0 = arith.constant 0 : i32
    %c0_i32_1 = arith.constant 0 : i32
    return %c0_i32, %c0_i32_0 : i32, i32
  }
  func.func @transform_2(%arg0: i32, %arg1: i32) -> (i32, i32) {
    %c0_i32 = arith.constant 0 : i32
    %c0_i32_0 = arith.constant 0 : i32
    %c0_i32_1 = arith.constant 0 : i32
    return %c0_i32, %c0_i32_0 : i32, i32
  }
  func.func @transform_3(%arg0: i32, %arg1: i32) -> (i32, i32, i32) {
    %c0_i32 = arith.constant 0 : i32
    %c0_i32_0 = arith.constant 0 : i32
    %c0_i32_1 = arith.constant 0 : i32
    return %arg0, %c0_i32, %c0_i32_0 : i32, i32, i32
  }
  func.func @transform_4(%arg0: i32, %arg1: i32) -> (i32, i32, i32) {
    %c0_i32 = arith.constant 0 : i32
    %c0_i32_0 = arith.constant 0 : i32
    %c0_i32_1 = arith.constant 0 : i32
    return %arg0, %c0_i32, %c0_i32_0 : i32, i32, i32
  }
  func.func @transform_5(%arg0: i32, %arg1: i32) -> (i32, i32) {
    %c0_i32 = arith.constant 0 : i32
    %c0_i32_0 = arith.constant 0 : i32
    %c0_i32_1 = arith.constant 0 : i32
    return %c0_i32, %c0_i32_0 : i32, i32
  }
}

</mosaic_0001>

<llo_original>
// kernel: graphsage_forward.1
$region0: #{graphsage_forward.1}
  #allocation0 [shape = 'u32[]', space=smem, size = 0x4, offset = 0x4, fixed_abs, tag = 'smem constant byte address 0x4 - core index']
  #allocation1 [shape = 'u32[144,128]{1,0:T(1,128)}', space=vmem, size = 0x12000, scoped, tag = 'internal scratch']
  #allocation2 [shape = 'bf16[64,128]{1,0:T(8,128)(2,1)}', space=vmem, size = 0x4000, scoped, tag = 'scratch operand']
  #allocation3 [shape = 'f32[64,128]{1,0:T(8,128)}', space=vmem, size = 0x8000, scoped, tag = 'scratch operand']
  #allocation4 [shape = 'bf16[64,256]{1,0:T(8,128)(2,1)}', space=vmem, size = 0x8000, scoped, tag = 'scratch operand']
  %s0 = inlined_call_operand.vmem [shape: bf16[64,64], index: 0, kind: input, shape index: {}]
  %s1 = inlined_call_operand.vmem [shape: bf16[64,128], index: 1, kind: input, shape index: {}]
  %s2 = inlined_call_operand.vmem [shape: f32[64,1], index: 2, kind: input, shape index: {}]
  %s3 = inlined_call_operand.vmem [shape: bf16[3,256,128], index: 3, kind: input, shape index: {}]
  %s4 = inlined_call_operand.vmem [shape: f32[3,1,128], index: 4, kind: input, shape index: {}]
  %s5 = inlined_call_operand.vmem [shape: f32[64,128], index: 5, kind: output, shape index: {}]
  %s6 = sld [smem:[#allocation0]]
  $region73: #{graphsage_forward.1} parent=0
    _
  %s8 = ssub.s32 1, %s6
  %s9 = scalar_select 0, %s8, %s6
  loop: start=0, step=1, limit=5
  $region2: #{graphsage_forward.1} parent=0 // loop_pre_header
    _
  $region3: #{graphsage_forward.1} parent=0 // loop_header
    %s11 = sphi 0, %s15
    %p12 = scmp.ge.s32.totalorder %s11, 5
    %s18 = sphi 0, %s30
    %s19 = sphi 0, %s26
    %s20 = sphi 0, %s18
    %s21 = sphi 0, %s19
    %s22 = sphi 0, %s20
    %s23 = sphi 0, %s21
    %s33 = sphi 0, %s35
    %s36 = sphi 0, %s33
    %s37 = sphi 0, %s36
    %s53 = sphi 0, %s37
    %s57 = sphi 0, %s57
    %s59 = sphi 0, %s57
    %s60 = sphi 0, %s59
    %s74 = sphi 0, %s60
    %s78 = sphi 0, %s78
    %s80 = sphi 0, %s78
    %s81 = sphi 0, %s80
    %s95 = sphi 0, %s81
    %s101 = sphi 0, %s103
    %s104 = sphi 0, %s101
    %s105 = sphi 0, %s104
    %s121 = sphi 0, %s105
    %s127 = sphi 0, %s129
    %s130 = sphi 0, %s127
    %s131 = sphi 0, %s130
    %s147 = sphi 0, %s131
    %s151 = sphi 0, %s151
    %s153 = sphi 0, %s151
    %s154 = sphi 0, %s153
    %s168 = sphi 0, %s154
  $region4: #{graphsage_forward.1} parent=0 // loop_header_branch
    %14 = sbr.rel (%p12) target = $region8
  $region5: #{graphsage_forward.1} parent=0 // loop_body
    %s16 = ssub.s32 %s11, 1
    %s17 = ssub.s32 %s11, 2
    %s24 = sadd.s32 1, %s19
    %p25 = scmp.ge.s32.totalorder %s24, 1
    %s26 = scalar_select %p25, 0, %s24
    %s27 = sadd.s32 1, %s18
    %s28 = scalar_select %p25, %s27, %s18
    %p29 = scmp.ge.s32.totalorder %s28, 3
    %s30 = scalar_select %p29, 0, %s28
    %s31 = ssub.s32 %s19, %s26
    %p32 = scmp.eq.s32.totalorder %s31, 0
    %s34 = sadd.s32 %s33, 1
    %s35 = scalar_select %p32, %s33, %s34
    %p38 = pneg %p32
    %p39 = scmp.eq.s32.totalorder %s11, 2
    %p40 = por %p38, %p39
    %p41 = scmp.ne.s32.totalorder %s33, %s36
    %p42 = scmp.eq.s32.totalorder %s11, 0
    %p43 = por %p41, %p42
    %p44 = scmp.ne.s32.totalorder %s33, %s36
    %p45 = scmp.eq.s32.totalorder %s16, 2
    %p46 = por %p44, %p45
    %p47 = scmp.ne.s32.totalorder %s36, %s37
    %p48 = scmp.eq.s32.totalorder %s16, 0
    %p49 = por %p47, %p48
    %p50 = scmp.ne.s32.totalorder %s36, %s37
    %p51 = scmp.eq.s32.totalorder %s17, 2
    %p52 = por %p50, %p51
    %p54 = scmp.ne.s32.totalorder %s37, %s53
    %p55 = scmp.eq.s32.totalorder %s17, 0
    %p56 = por %p54, %p55
    %s58 = sadd.s32 %s57, 1
    %p61 = scmp.eq.s32.totalorder %s11, 2
    %p62 = scmp.ne.s32.totalorder %s57, %s59
    %p63 = scmp.eq.s32.totalorder %s11, 0
    %p64 = por %p62, %p63
    %p65 = scmp.ne.s32.totalorder %s57, %s59
    %p66 = scmp.eq.s32.totalorder %s16, 2
    %p67 = por %p65, %p66
    %p68 = scmp.ne.s32.totalorder %s59, %s60
    %p69 = scmp.eq.s32.totalorder %s16, 0
    %p70 = por %p68, %p69
    %p71 = scmp.ne.s32.totalorder %s59, %s60
    %p72 = scmp.eq.s32.totalorder %s17, 2
    %p73 = por %p71, %p72
    %p75 = scmp.ne.s32.totalorder %s60, %s74
    %p76 = scmp.eq.s32.totalorder %s17, 0
    %p77 = por %p75, %p76
    %s79 = sadd.s32 %s78, 1
    %p82 = scmp.eq.s32.totalorder %s11, 2
    %p83 = scmp.ne.s32.totalorder %s78, %s80
    %p84 = scmp.eq.s32.totalorder %s11, 0
    %p85 = por %p83, %p84
    %p86 = scmp.ne.s32.totalorder %s78, %s80
    %p87 = scmp.eq.s32.totalorder %s16, 2
    %p88 = por %p86, %p87
    %p89 = scmp.ne.s32.totalorder %s80, %s81
    %p90 = scmp.eq.s32.totalorder %s16, 0
    %p91 = por %p89, %p90
    %p92 = scmp.ne.s32.totalorder %s80, %s81
    %p93 = scmp.eq.s32.totalorder %s17, 2
    %p94 = por %p92, %p93
    %p96 = scmp.ne.s32.totalorder %s81, %s95
    %p97 = scmp.eq.s32.totalorder %s17, 0
    %p98 = por %p96, %p97
    %s99 = ssub.s32 %s18, %s30
    %p100 = scmp.eq.s32.totalorder %s99, 0
    %s102 = sadd.s32 %s101, 1
    %s103 = scalar_select %p100, %s101, %s102
    %p106 = pneg %p100
    %p107 = scmp.eq.s32.totalorder %s11, 2
    %p108 = por %p106, %p107
    %p109 = scmp.ne.s32.totalorder %s101, %s104
    %p110 = scmp.eq.s32.totalorder %s11, 0
    %p111 = por %p109, %p110
    %p112 = scmp.ne.s32.totalorder %s101, %s104
    %p113 = scmp.eq.s32.totalorder %s16, 2
    %p114 = por %p112, %p113
    %p115 = scmp.ne.s32.totalorder %s104, %s105
    %p116 = scmp.eq.s32.totalorder %s16, 0
    %p117 = por %p115, %p116
    %p118 = scmp.ne.s32.totalorder %s104, %s105
    %p119 = scmp.eq.s32.totalorder %s17, 2
    %p120 = por %p118, %p119
    %p122 = scmp.ne.s32.totalorder %s105, %s121
    %p123 = scmp.eq.s32.totalorder %s17, 0
    %p124 = por %p122, %p123
    %s125 = ssub.s32 %s18, %s30
    %p126 = scmp.eq.s32.totalorder %s125, 0
    %s128 = sadd.s32 %s127, 1
    %s129 = scalar_select %p126, %s127, %s128
    %p132 = pneg %p126
    %p133 = scmp.eq.s32.totalorder %s11, 2
    %p134 = por %p132, %p133
    %p135 = scmp.ne.s32.totalorder %s127, %s130
    %p136 = scmp.eq.s32.totalorder %s11, 0
    %p137 = por %p135, %p136
    %p138 = scmp.ne.s32.totalorder %s127, %s130
    %p139 = scmp.eq.s32.totalorder %s16, 2
    %p140 = por %p138, %p139
    %p141 = scmp.ne.s32.totalorder %s130, %s131
    %p142 = scmp.eq.s32.totalorder %s16, 0
    %p143 = por %p141, %p142
    %p144 = scmp.ne.s32.totalorder %s130, %s131
    %p145 = scmp.eq.s32.totalorder %s17, 2
    %p146 = por %p144, %p145
    %p148 = scmp.ne.s32.totalorder %s131, %s147
    %p149 = scmp.eq.s32.totalorder %s17, 0
    %p150 = por %p148, %p149
    %s152 = sadd.s32 %s151, 1
    %p155 = scmp.eq.s32.totalorder %s11, 2
    %p156 = scmp.ne.s32.totalorder %s151, %s153
    %p157 = scmp.eq.s32.totalorder %s11, 0
    %p158 = por %p156, %p157
    %p159 = scmp.ne.s32.totalorder %s151, %s153
    %p160 = scmp.eq.s32.totalorder %s16, 2
    %p161 = por %p159, %p160
    %p162 = scmp.ne.s32.totalorder %s153, %s154
    %p163 = scmp.eq.s32.totalorder %s16, 0
    %p164 = por %p162, %p163
    %p165 = scmp.ne.s32.totalorder %s153, %s154
    %p166 = scmp.eq.s32.totalorder %s17, 2
    %p167 = por %p165, %p166
    %p169 = scmp.ne.s32.totalorder %s154, %s168
    %p170 = scmp.eq.s32.totalorder %s17, 0
    %p171 = por %p169, %p170
    %p172 = scmp.le.s32.totalorder 1, %s11
    %p173 = scmp.lt.s32.totalorder %s11, 4
    %p174 = pnand %p172, %p173
    %p175 = pneg %p174
    // Predicated region
    $region9: #{graphsage_forward.1} parent=5 // pred_check
      _
    $region10: #{graphsage_forward.1} parent=5 // pred_check_branch
      %177 = sbr.rel (%p174) target = $region12
    $region11: #{graphsage_forward.1} parent=5 // pred_region
      %s178 = ssub.s32 %s11, 1
      // Predicated region
      $region13: #{graphsage_forward.1} parent=11 // pred_check
        %p179 = pneg %p49
      $region14: #{graphsage_forward.1} parent=11 // pred_check_branch
        %181 = sbr.rel (%p179) target = $region16
      $region15: #{graphsage_forward.1} parent=11 // pred_region
        %p182 = scmp.lt.s32.totalorder %s21, 0
        %s183 = scalar_select %p182, %s21, 0
        %s184 = smul.addr %s183, 4
        %s185 = scalar_lea.vmem %s0, %s184
      $region16: #{graphsage_forward.1} parent=11 // pred_fallthru
        _
      // Predicated region
      $region17: #{graphsage_forward.1} parent=11 // pred_check
        %p186 = pneg %p70
      $region18: #{graphsage_forward.1} parent=11 // pred_check_branch
        %188 = sbr.rel (%p186) target = $region20
      $region19: #{graphsage_forward.1} parent=11 // pred_region
        _
      $region20: #{graphsage_forward.1} parent=11 // pred_fallthru
        _
      // Predicated region
      $region21: #{graphsage_forward.1} parent=11 // pred_check
        %p189 = pneg %p91
      $region22: #{graphsage_forward.1} parent=11 // pred_check_branch
        %191 = sbr.rel (%p189) target = $region24
      $region23: #{graphsage_forward.1} parent=11 // pred_region
        _
      $region24: #{graphsage_forward.1} parent=11 // pred_fallthru
        _
    $region12: #{graphsage_forward.1} parent=5 // pred_fallthru
      _
    %p192 = scmp.lt.s32.totalorder %s11, 3
    // Predicated region
    $region25: #{graphsage_forward.1} parent=5 // pred_check
      %p193 = pneg %p192
    $region26: #{graphsage_forward.1} parent=5 // pred_check_branch
      %195 = sbr.rel (%p193) target = $region28
    $region27: #{graphsage_forward.1} parent=5 // pred_region
      // Predicated region
      $region29: #{graphsage_forward.1} parent=27 // pred_check
        %p196 = pneg %p111
      $region30: #{graphsage_forward.1} parent=27 // pred_check_branch
        %198 = sbr.rel (%p196) target = $region32
      $region31: #{graphsage_forward.1} parent=27 // pred_region
        %p199 = scmp.lt.s32.totalorder %s18, 2
        %s200 = scalar_select %p199, %s18, 2
        %s201 = smul.addr %s200, 32
        %s202 = smul.addr %s201, 4
        %s203 = scalar_lea.vmem %s3, %s202
      $region32: #{graphsage_forward.1} parent=27 // pred_fallthru
        _
      // Predicated region
      $region33: #{graphsage_forward.1} parent=27 // pred_check
        %p204 = pneg %p137
      $region34: #{graphsage_forward.1} parent=27 // pred_check_branch
        %206 = sbr.rel (%p204) target = $region36
      $region35: #{graphsage_forward.1} parent=27 // pred_region
        %p207 = scmp.lt.s32.totalorder %s18, 2
        %s208 = scalar_select %p207, %s18, 2
        %s209 = scalar_lea.vmem %s4, %s208
      $region36: #{graphsage_forward.1} parent=27 // pred_fallthru
        _
    $region28: #{graphsage_forward.1} parent=5 // pred_fallthru
      _
    %p210 = scmp.le.s32.totalorder 1, %s11
    %p211 = scmp.lt.s32.totalorder %s11, 4
    %p212 = pnand %p210, %p211
    %p213 = pneg %p212
    // Predicated region
    $region37: #{graphsage_forward.1} parent=5 // pred_check
      _
    $region38: #{graphsage_forward.1} parent=5 // pred_check_branch
      %215 = sbr.rel (%p212) target = $region40
    $region39: #{graphsage_forward.1} parent=5 // pred_region
      %s216 = ssub.s32 %s11, 1
      %p217 = scmp.lt.s32.totalorder %s21, 0
      %s218 = scalar_select %p217, %s21, 0
      %s219 = smul.addr %s218, 4
      %s220 = scalar_lea.vmem %s0, %s219
      %p221 = pneg %p49
      %p222 = pneg %p46
      %p223 = pneg %p70
      %p224 = pneg %p67
      %p225 = pneg %p91
      %p226 = pneg %p88
      %p227 = scmp.lt.s32.totalorder %s20, 2
      %s228 = scalar_select %p227, %s20, 2
      %s229 = smul.addr %s228, 32
      %s230 = smul.addr %s229, 4
      %s231 = scalar_lea.vmem %s3, %s230
      %p232 = pneg %p117
      %p233 = pneg %p114
      %p234 = scmp.lt.s32.totalorder %s20, 2
      %s235 = scalar_select %p234, %s20, 2
      %s236 = scalar_lea.vmem %s4, %s235
      %p237 = pneg %p143
      %p238 = pneg %p140
      %p239 = pneg %p164
      %p240 = pneg %p161
      %p241 = scmp.lt.s32.totalorder %s21, 0
      %s242 = scalar_select %p241, %s21, 0
      %s243 = smul.addr %s242, 4
      %s244 = scalar_lea.vmem %s0, %s243
      %p245 = scmp.lt.s32.totalorder %s20, 2
      %s246 = scalar_select %p245, %s20, 2
      %s247 = smul.addr %s246, 32
      %s248 = smul.addr %s247, 4
      %s249 = scalar_lea.vmem %s3, %s248
      %p250 = scmp.lt.s32.totalorder %s20, 2
      %s251 = scalar_select %p250, %s20, 2
      %s252 = scalar_lea.vmem %s4, %s251
      %p254 = scmp.eq.s32.totalorder %s20, 0
      %p255 = scmp.eq.s32.totalorder %s21, 0
      %p256 = pnand %p254, %p255
      %p257 = pneg %p256
      // Predicated region
      $region41: #{graphsage_forward.1} parent=39 // pred_check
        _
      $region42: #{graphsage_forward.1} parent=39 // pred_check_branch
        %259 = sbr.rel (%p256) target = $region44
      $region43: #{graphsage_forward.1} parent=39 // pred_region
        %v260 = vld [vmem:[%s1] sm:$0xf]
        %v261 = vld [vmem:[%s1 + $0x4] sm:$0xf]
        %v262 = vld [vmem:[%s1 + $0x8] sm:$0xf]
        %v263 = vld [vmem:[%s1 + $0xc] sm:$0xf]
        %v264 = vld [vmem:[%s1 + $0x10] sm:$0xf]
        %v265 = vld [vmem:[%s1 + $0x14] sm:$0xf]
        %v266 = vld [vmem:[%s1 + $0x18] sm:$0xf]
        %v267 = vld [vmem:[%s1 + $0x1c] sm:$0xf]
        %268 = vst [vmem:[#allocation2] sm:$0xf] %v260
        %269 = vst [vmem:[#allocation2 + $0x4] sm:$0xf] %v261
        %270 = vst [vmem:[#allocation2 + $0x8] sm:$0xf] %v262
        %271 = vst [vmem:[#allocation2 + $0xc] sm:$0xf] %v263
        %272 = vst [vmem:[#allocation2 + $0x10] sm:$0xf] %v264
        %273 = vst [vmem:[#allocation2 + $0x14] sm:$0xf] %v265
        %274 = vst [vmem:[#allocation2 + $0x18] sm:$0xf] %v266
        %275 = vst [vmem:[#allocation2 + $0x1c] sm:$0xf] %v267
      $region44: #{graphsage_forward.1} parent=39 // pred_fallthru
        _
      // Predicated region
      $region45: #{graphsage_forward.1} parent=39 // pred_check
        %p276 = pneg %p255
      $region46: #{graphsage_forward.1} parent=39 // pred_check_branch
        %278 = sbr.rel (%p276) target = $region48
      $region47: #{graphsage_forward.1} parent=39 // pred_region
        %279 = vst [vmem:[#allocation3] sm:$0xff] 0.0
        %280 = vst [vmem:[#allocation3 + $0x8] sm:$0xff] 0.0
        %281 = vst [vmem:[#allocation3 + $0x10] sm:$0xff] 0.0
        %282 = vst [vmem:[#allocation3 + $0x18] sm:$0xff] 0.0
        %283 = vst [vmem:[#allocation3 + $0x20] sm:$0xff] 0.0
        %284 = vst [vmem:[#allocation3 + $0x28] sm:$0xff] 0.0
        %285 = vst [vmem:[#allocation3 + $0x30] sm:$0xff] 0.0
        %286 = vst [vmem:[#allocation3 + $0x38] sm:$0xff] 0.0
      $region48: #{graphsage_forward.1} parent=39 // pred_fallthru
        _
      %s287 = smul.u32 %s21, 64
      %s288 = sshra.s32 %s287, 3
      %s289 = sand.u32 %s287, 7
      %s290 = smul.addr %s288, 4
      %s291 = scalar_lea.vmem [#allocation2], %s290
      %v292 = vld [vmem:[%s291] sm:$0xf]
      %v293 = vld [vmem:[%s291 + $0x4] sm:$0xf]
      %v294 = vld [vmem:[%s291 + $0x8] sm:$0xf]
      %v295 = vld [vmem:[%s291 + $0xc] sm:$0xf]
      %v296 = vld [vmem:[%s291 + $0x10] sm:$0xf]
      %v297 = vld [vmem:[%s291 + $0x14] sm:$0xf]
      %v298 = vld [vmem:[%s291 + $0x18] sm:$0xf]
      %v299 = vld [vmem:[%s291 + $0x1c] sm:$0xf]
      %v300 = vld [vmem:[#allocation3] sm:$0xff]
      %v301 = vld [vmem:[#allocation3 + $0x8] sm:$0xff]
      %v302 = vld [vmem:[#allocation3 + $0x10] sm:$0xff]
      %v303 = vld [vmem:[#allocation3 + $0x18] sm:$0xff]
      %v304 = vld [vmem:[#allocation3 + $0x20] sm:$0xff]
      %v305 = vld [vmem:[#allocation3 + $0x28] sm:$0xff]
      %v306 = vld [vmem:[#allocation3 + $0x30] sm:$0xff]
      %v307 = vld [vmem:[#allocation3 + $0x38] sm:$0xff]
      %v308 = vld [vmem:[%s244] sm:$0xf]
      %v309 = vld [vmem:[%s244 + $0x4] sm:$0xf]
      %v310 = vld [vmem:[%s244 + $0x8] sm:$0xf]
      %v311 = vld [vmem:[%s244 + $0xc] sm:$0xf]
      %v312 = vld [vmem:[%s244 + $0x10] sm:$0xf]
      %v313 = vld [vmem:[%s244 + $0x14] sm:$0xf]
      %v314 = vld [vmem:[%s244 + $0x18] sm:$0xf]
      %v315 = vld [vmem:[%s244 + $0x1c] sm:$0xf]
      %v324 = vunpack.c.l.b16 %v308
      %v325 = vunpack.c.l.b16 %v309
      %v326 = vunpack.c.l.b16 %v310
      %v327 = vunpack.c.l.b16 %v311
      %v328 = vunpack.c.l.b16 %v312
      %v329 = vunpack.c.l.b16 %v313
      %v330 = vunpack.c.l.b16 %v314
      %v331 = vunpack.c.l.b16 %v315
      %v332 = vpack.c.b16 %v325, %v324
      %v333 = vpack.c.b16 %v327, %v326
      %v334 = vpack.c.b16 %v329, %v328
      %v335 = vpack.c.b16 %v331, %v330
      %v344 = vunpack.c.l.b16 %v292
      %v345 = vunpack.c.l.b16 %v293
      %v346 = vunpack.c.l.b16 %v294
      %v347 = vunpack.c.l.b16 %v295
      %v348 = vunpack.c.l.b16 %v296
      %v349 = vunpack.c.l.b16 %v297
      %v350 = vunpack.c.l.b16 %v298
      %v351 = vunpack.c.l.b16 %v299
      %v352 = vpack.c.b16 %v345, %v344
      %v353 = vpack.c.b16 %v347, %v346
      %v354 = vpack.c.b16 %v349, %v348
      %v355 = vpack.c.b16 %v351, %v350
      %vm360 = vcmask 523264
      %v362 = vsel %vm360, %v332, 0
      %v365 = vsel %vm360, %v333, 0
      %v368 = vsel %vm360, %v334, 0
      %v371 = vsel %vm360, %v335, 0
      %373 = vmatprep.subr.bf16.mxu0 0
      %374 = vmatpush1.bf16.msra.mxu0 0
      %375 = vmatprep.subr.bf16.mxu0 0
      %376 = vmatpush1.bf16.msra.mxu0 0
      %377 = vmatprep.subr.bf16.mxu0 0
      %378 = vmatpush1.bf16.msra.mxu0 0
      %379 = vmatprep.subr.bf16.mxu0 0
      %380 = vmatpush1.bf16.msra.mxu0 0
      %381 = vmatprep.subr.bf16.mxu0 0
      %382 = vmatpush1.bf16.msra.mxu0 %v355
      %383 = vmatprep.subr.bf16.mxu0 0
      %384 = vmatpush1.bf16.msra.mxu0 %v354
      %385 = vmatprep.subr.bf16.mxu0 0
      %386 = vmatpush1.bf16.msra.mxu0 %v353
      %387 = vmatprep.subr.bf16.mxu0 0
      %388 = vmatpush1.bf16.msra.mxu0 %v352
      %389 = vmatprep.subr.bf16.mxu0 0
      %390 = vmatpush2.bf16.msra.mxu0 0
      %391 = vmatprep.subr.bf16.mxu0 0
      %392 = vmatpush2.bf16.msra.mxu0 0
      %393 = vmatprep.subr.bf16.mxu0 0
      %394 = vmatpush2.bf16.msra.mxu0 0
      %395 = vmatprep.subr.bf16.mxu0 0
      %396 = vmatpush2.bf16.msra.mxu0 0
      %397 = vmatprep.subr.bf16.mxu0 0
      %398 = vmatpush2.bf16.msra.mxu0 0
      %399 = vmatprep.subr.bf16.mxu0 0
      %400 = vmatpush2.bf16.msra.mxu0 0
      %401 = vmatprep.subr.bf16.mxu0 0
      %402 = vmatpush2.bf16.msra.mxu0 0
      %403 = vmatprep.subr.bf16.mxu0 0
      %404 = vmatpush2.bf16.msra.mxu0 0
      %405 = vmatprep.mubr.bf16.mxu0 0
      %406 = vmatmul.mubr.bf16.gmra.mxu0 %v362
      %v407 = vpop.f32.mrf.mxu0
      %v408 = vadd.f32 0.0, %v407
      %v409 = vpop.f32.mrf.mxu0
      %v410 = vpop.f32.mrf.mxu0
      %v411 = vadd.f32 0.0, %v410
      %v412 = vpop.f32.mrf.mxu0
      %413 = vmatprep.mubr.bf16.mxu0 0
      %414 = vmatmul.mubr.bf16.gmra.mxu0 %v365
      %v415 = vpop.f32.mrf.mxu0
      %v416 = vadd.f32 0.0, %v415
      %v417 = vpop.f32.mrf.mxu0
      %v418 = vpop.f32.mrf.mxu0
      %v419 = vadd.f32 0.0, %v418
      %v420 = vpop.f32.mrf.mxu0
      %421 = vmatprep.mubr.bf16.mxu0 0
      %422 = vmatmul.mubr.bf16.gmra.mxu0 %v368
      %v423 = vpop.f32.mrf.mxu0
      %v424 = vadd.f32 0.0, %v423
      %v425 = vpop.f32.mrf.mxu0
      %v426 = vpop.f32.mrf.mxu0
      %v427 = vadd.f32 0.0, %v426
      %v428 = vpop.f32.mrf.mxu0
      %429 = vmatprep.mubr.bf16.mxu0 0
      %430 = vmatmul.mubr.bf16.gmra.mxu0 %v371
      %v431 = vpop.f32.mrf.mxu0
      %v432 = vadd.f32 0.0, %v431
      %v433 = vpop.f32.mrf.mxu0
      %v434 = vpop.f32.mrf.mxu0
      %v435 = vadd.f32 0.0, %v434
      %v436 = vpop.f32.mrf.mxu0
      %437 = vdwg.mxu0
      %v438 = vadd.f32 %v300, %v408
      %v439 = vadd.f32 %v301, %v411
      %v440 = vadd.f32 %v302, %v416
      %v441 = vadd.f32 %v303, %v419
      %v442 = vadd.f32 %v304, %v424
      %v443 = vadd.f32 %v305, %v427
      %v444 = vadd.f32 %v306, %v432
      %v445 = vadd.f32 %v307, %v435
      %446 = vst [vmem:[#allocation3] sm:$0xff] %v438
      %447 = vst [vmem:[#allocation3 + $0x8] sm:$0xff] %v439
      %448 = vst [vmem:[#allocation3 + $0x10] sm:$0xff] %v440
      %449 = vst [vmem:[#allocation3 + $0x18] sm:$0xff] %v441
      %450 = vst [vmem:[#allocation3 + $0x20] sm:$0xff] %v442
      %451 = vst [vmem:[#allocation3 + $0x28] sm:$0xff] %v443
      %452 = vst [vmem:[#allocation3 + $0x30] sm:$0xff] %v444
      %453 = vst [vmem:[#allocation3 + $0x38] sm:$0xff] %v445
      // Predicated region
      $region49: #{graphsage_forward.1} parent=39 // pred_check
        %p454 = pneg %p255
      $region50: #{graphsage_forward.1} parent=39 // pred_check_branch
        %456 = sbr.rel (%p454) target = $region52
      $region51: #{graphsage_forward.1} parent=39 // pred_region
        %v457 = vld [vmem:[#allocation3] sm:$0xff]
        %v458 = vld [vmem:[#allocation3 + $0x8] sm:$0xff]
        %v459 = vld [vmem:[#allocation3 + $0x10] sm:$0xff]
        %v460 = vld [vmem:[#allocation3 + $0x18] sm:$0xff]
        %v461 = vld [vmem:[#allocation3 + $0x20] sm:$0xff]
        %v462 = vld [vmem:[#allocation3 + $0x28] sm:$0xff]
        %v463 = vld [vmem:[#allocation3 + $0x30] sm:$0xff]
        %v464 = vld [vmem:[#allocation3 + $0x38] sm:$0xff]
        %v465 = vld [vmem:[%s2] sm:$0xff]
        %v466 = vld [vmem:[%s2 + $0x8] sm:$0xff]
        %v467 = vld [vmem:[%s2 + $0x10] sm:$0xff]
        %v468 = vld [vmem:[%s2 + $0x18] sm:$0xff]
        %v469 = vld [vmem:[%s2 + $0x20] sm:$0xff]
        %v470 = vld [vmem:[%s2 + $0x28] sm:$0xff]
        %v471 = vld [vmem:[%s2 + $0x30] sm:$0xff]
        %v472 = vld [vmem:[%s2 + $0x38] sm:$0xff]
        %474 = vset.pattern.permute.xlu0 0
        %475 = vperm.xlu0 %474, %v465
        %v476 = vpop.permute.xlu0 %475
        %479 = vset.pattern.permute.xlu0 0
        %480 = vperm.xlu0 %479, %v466
        %v481 = vpop.permute.xlu0 %480
        %484 = vset.pattern.permute.xlu0 0
        %485 = vperm.xlu0 %484, %v467
        %v486 = vpop.permute.xlu0 %485
        %489 = vset.pattern.permute.xlu0 0
        %490 = vperm.xlu0 %489, %v468
        %v491 = vpop.permute.xlu0 %490
        %494 = vset.pattern.permute.xlu0 0
        %495 = vperm.xlu0 %494, %v469
        %v496 = vpop.permute.xlu0 %495
        %499 = vset.pattern.permute.xlu0 0
        %500 = vperm.xlu0 %499, %v470
        %v501 = vpop.permute.xlu0 %500
        %504 = vset.pattern.permute.xlu0 0
        %505 = vperm.xlu0 %504, %v471
        %v506 = vpop.permute.xlu0 %505
        %509 = vset.pattern.permute.xlu0 0
        %510 = vperm.xlu0 %509, %v472
        %v511 = vpop.permute.xlu0 %510
        %v513 = vmul.f32 %v457, %v476
        %v514 = vmul.f32 %v458, %v481
        %v515 = vmul.f32 %v459, %v486
        %v516 = vmul.f32 %v460, %v491
        %v517 = vmul.f32 %v461, %v496
        %v518 = vmul.f32 %v462, %v501
        %v519 = vmul.f32 %v463, %v506
        %v520 = vmul.f32 %v464, %v511
        %v521 = vpack.c.bf16 %v514, %v513
        %v522 = vpack.c.bf16 %v516, %v515
        %v523 = vpack.c.bf16 %v518, %v517
        %v524 = vpack.c.bf16 %v520, %v519
        %v529 = vunpack.c.l.b16 %v521
        %v530 = vunpack.c.h.b16 %v521
        %v531 = vunpack.c.l.b16 %v522
        %v532 = vunpack.c.h.b16 %v522
        %v533 = vunpack.c.l.b16 %v523
        %v534 = vunpack.c.h.b16 %v523
        %v535 = vunpack.c.l.b16 %v524
        %v536 = vunpack.c.h.b16 %v524
        %v537 = vpack.c.b16 %v529, %v529
        %v538 = vpack.c.b16 %v530, %v530
        %v539 = vpack.c.b16 %v531, %v531
        %v540 = vpack.c.b16 %v532, %v532
        %v541 = vpack.c.b16 %v533, %v533
        %v542 = vpack.c.b16 %v534, %v534
        %v543 = vpack.c.b16 %v535, %v535
        %v544 = vpack.c.b16 %v536, %v536
        %553 = vst [vmem:[#allocation4] sm:$0xf] %v537
        %554 = vst [vmem:[#allocation4 + $0x8] sm:$0xf] %v538
        %555 = vst [vmem:[#allocation4 + $0x10] sm:$0xf] %v539
        %556 = vst [vmem:[#allocation4 + $0x18] sm:$0xf] %v540
        %557 = vst [vmem:[#allocation4 + $0x20] sm:$0xf] %v541
        %558 = vst [vmem:[#allocation4 + $0x28] sm:$0xf] %v542
        %559 = vst [vmem:[#allocation4 + $0x30] sm:$0xf] %v543
        %560 = vst [vmem:[#allocation4 + $0x38] sm:$0xf] %v544
        %v561 = vld [vmem:[#allocation2] sm:$0xf]
        %v562 = vld [vmem:[#allocation2 + $0x4] sm:$0xf]
        %v563 = vld [vmem:[#allocation2 + $0x8] sm:$0xf]
        %v564 = vld [vmem:[#allocation2 + $0xc] sm:$0xf]
        %v565 = vld [vmem:[#allocation2 + $0x10] sm:$0xf]
        %v566 = vld [vmem:[#allocation2 + $0x14] sm:$0xf]
        %v567 = vld [vmem:[#allocation2 + $0x18] sm:$0xf]
        %v568 = vld [vmem:[#allocation2 + $0x1c] sm:$0xf]
        %569 = vst [vmem:[#allocation4 + $0x4] sm:$0xf] %v561
        %570 = vst [vmem:[#allocation4 + $0xc] sm:$0xf] %v562
        %571 = vst [vmem:[#allocation4 + $0x14] sm:$0xf] %v563
        %572 = vst [vmem:[#allocation4 + $0x1c] sm:$0xf] %v564
        %573 = vst [vmem:[#allocation4 + $0x24] sm:$0xf] %v565
        %574 = vst [vmem:[#allocation4 + $0x2c] sm:$0xf] %v566
        %575 = vst [vmem:[#allocation4 + $0x34] sm:$0xf] %v567
        %576 = vst [vmem:[#allocation4 + $0x3c] sm:$0xf] %v568
        %v577 = vld [vmem:[#allocation4] sm:$0xff]
        %v578 = vld [vmem:[#allocation4 + $0x8] sm:$0xff]
        %v579 = vld [vmem:[#allocation4 + $0x10] sm:$0xff]
        %v580 = vld [vmem:[#allocation4 + $0x18] sm:$0xff]
        %v581 = vld [vmem:[#allocation4 + $0x20] sm:$0xff]
        %v582 = vld [vmem:[#allocation4 + $0x28] sm:$0xff]
        %v583 = vld [vmem:[#allocation4 + $0x30] sm:$0xff]
        %v584 = vld [vmem:[#allocation4 + $0x38] sm:$0xff]
        %v585 = vld [vmem:[%s249] sm:$0xf]
        %v586 = vld [vmem:[%s249 + $0x4] sm:$0xf]
        %v587 = vld [vmem:[%s249 + $0x8] sm:$0xf]
        %v588 = vld [vmem:[%s249 + $0xc] sm:$0xf]
        %v589 = vld [vmem:[%s249 + $0x10] sm:$0xf]
        %v590 = vld [vmem:[%s249 + $0x14] sm:$0xf]
        %v591 = vld [vmem:[%s249 + $0x18] sm:$0xf]
        %v592 = vld [vmem:[%s249 + $0x1c] sm:$0xf]
        %v593 = vld [vmem:[%s249 + $0x20] sm:$0xf]
        %v594 = vld [vmem:[%s249 + $0x24] sm:$0xf]
        %v595 = vld [vmem:[%s249 + $0x28] sm:$0xf]
        %v596 = vld [vmem:[%s249 + $0x2c] sm:$0xf]
        %v597 = vld [vmem:[%s249 + $0x30] sm:$0xf]
        %v598 = vld [vmem:[%s249 + $0x34] sm:$0xf]
        %v599 = vld [vmem:[%s249 + $0x38] sm:$0xf]
        %v600 = vld [vmem:[%s249 + $0x3c] sm:$0xf]
        %v601 = vld [vmem:[%s249 + $0x40] sm:$0xf]
        %v602 = vld [vmem:[%s249 + $0x44] sm:$0xf]
        %v603 = vld [vmem:[%s249 + $0x48] sm:$0xf]
        %v604 = vld [vmem:[%s249 + $0x4c] sm:$0xf]
        %v605 = vld [vmem:[%s249 + $0x50] sm:$0xf]
        %v606 = vld [vmem:[%s249 + $0x54] sm:$0xf]
        %v607 = vld [vmem:[%s249 + $0x58] sm:$0xf]
        %v608 = vld [vmem:[%s249 + $0x5c] sm:$0xf]
        %v609 = vld [vmem:[%s249 + $0x60] sm:$0xf]
        %v610 = vld [vmem:[%s249 + $0x64] sm:$0xf]
        %v611 = vld [vmem:[%s249 + $0x68] sm:$0xf]
        %v612 = vld [vmem:[%s249 + $0x6c] sm:$0xf]
        %v613 = vld [vmem:[%s249 + $0x70] sm:$0xf]
        %v614 = vld [vmem:[%s249 + $0x74] sm:$0xf]
        %v615 = vld [vmem:[%s249 + $0x78] sm:$0xf]
        %v616 = vld [vmem:[%s249 + $0x7c] sm:$0xf]
        %v617 = vld [vmem:[%s252] sm:$0x1]
        %v619 = vlaneseq
        %v620 = vshrl.u32 %v619, 7
        %v621 = vsub.s32 0, %v620
        %v622 = vrot.slane %v617, %v621
        %v632 = vunpack.c.l.b16 %v577
        %v633 = vunpack.c.h.b16 %v577
        %v634 = vunpack.c.l.b16 %v578
        %v635 = vunpack.c.h.b16 %v578
        %v636 = vunpack.c.l.b16 %v579
        %v637 = vunpack.c.h.b16 %v579
        %v638 = vunpack.c.l.b16 %v580
        %v639 = vunpack.c.h.b16 %v580
        %v640 = vunpack.c.l.b16 %v581
        %v641 = vunpack.c.h.b16 %v581
        %v642 = vunpack.c.l.b16 %v582
        %v643 = vunpack.c.h.b16 %v582
        %v644 = vunpack.c.l.b16 %v583
        %v645 = vunpack.c.h.b16 %v583
        %v646 = vunpack.c.l.b16 %v584
        %v647 = vunpack.c.h.b16 %v584
        %v648 = vpack.c.b16 %v634, %v632
        %v649 = vpack.c.b16 %v635, %v633
        %v650 = vpack.c.b16 %v638, %v636
        %v651 = vpack.c.b16 %v639, %v637
        %v652 = vpack.c.b16 %v642, %v640
        %v653 = vpack.c.b16 %v643, %v641
        %v654 = vpack.c.b16 %v646, %v644
        %v655 = vpack.c.b16 %v647, %v645
        %v696 = vunpack.c.l.b16 %v585
        %v697 = vunpack.c.l.b16 %v586
        %v698 = vunpack.c.l.b16 %v587
        %v699 = vunpack.c.l.b16 %v588
        %v700 = vunpack.c.l.b16 %v589
        %v701 = vunpack.c.l.b16 %v590
        %v702 = vunpack.c.l.b16 %v591
        %v703 = vunpack.c.l.b16 %v592
        %v704 = vunpack.c.l.b16 %v593
        %v705 = vunpack.c.l.b16 %v594
        %v706 = vunpack.c.l.b16 %v595
        %v707 = vunpack.c.l.b16 %v596
        %v708 = vunpack.c.l.b16 %v597
        %v709 = vunpack.c.l.b16 %v598
        %v710 = vunpack.c.l.b16 %v599
        %v711 = vunpack.c.l.b16 %v600
        %v712 = vunpack.c.l.b16 %v601
        %v713 = vunpack.c.l.b16 %v602
        %v714 = vunpack.c.l.b16 %v603
        %v715 = vunpack.c.l.b16 %v604
        %v716 = vunpack.c.l.b16 %v605
        %v717 = vunpack.c.l.b16 %v606
        %v718 = vunpack.c.l.b16 %v607
        %v719 = vunpack.c.l.b16 %v608
        %v720 = vunpack.c.l.b16 %v609
        %v721 = vunpack.c.l.b16 %v610
        %v722 = vunpack.c.l.b16 %v611
        %v723 = vunpack.c.l.b16 %v612
        %v724 = vunpack.c.l.b16 %v613
        %v725 = vunpack.c.l.b16 %v614
        %v726 = vunpack.c.l.b16 %v615
        %v727 = vunpack.c.l.b16 %v616
        %v728 = vpack.c.b16 %v697, %v696
        %v729 = vpack.c.b16 %v699, %v698
        %v730 = vpack.c.b16 %v701, %v700
        %v731 = vpack.c.b16 %v703, %v702
        %v732 = vpack.c.b16 %v705, %v704
        %v733 = vpack.c.b16 %v707, %v706
        %v734 = vpack.c.b16 %v709, %v708
        %v735 = vpack.c.b16 %v711, %v710
        %v736 = vpack.c.b16 %v713, %v712
        %v737 = vpack.c.b16 %v715, %v714
        %v738 = vpack.c.b16 %v717, %v716
        %v739 = vpack.c.b16 %v719, %v718
        %v740 = vpack.c.b16 %v721, %v720
        %v741 = vpack.c.b16 %v723, %v722
        %v742 = vpack.c.b16 %v725, %v724
        %v743 = vpack.c.b16 %v727, %v726
        %760 = vmatprep.subr.bf16.mxu0 0
        %761 = vmatpush1.bf16.msra.mxu0 %v735
        %762 = vmatprep.subr.bf16.mxu0 0
        %763 = vmatpush1.bf16.msra.mxu0 %v734
        %764 = vmatprep.subr.bf16.mxu0 0
        %765 = vmatpush1.bf16.msra.mxu0 %v733
        %766 = vmatprep.subr.bf16.mxu0 0
        %767 = vmatpush1.bf16.msra.mxu0 %v732
        %768 = vmatprep.subr.bf16.mxu0 0
        %769 = vmatpush1.bf16.msra.mxu0 %v731
        %770 = vmatprep.subr.bf16.mxu0 0
        %771 = vmatpush1.bf16.msra.mxu0 %v730
        %772 = vmatprep.subr.bf16.mxu0 0
        %773 = vmatpush1.bf16.msra.mxu0 %v729
        %774 = vmatprep.subr.bf16.mxu0 0
        %775 = vmatpush1.bf16.msra.mxu0 %v728
        %776 = vmatprep.subr.bf16.mxu0 0
        %777 = vmatpush2.bf16.msra.mxu0 %v743
        %778 = vmatprep.subr.bf16.mxu0 0
        %779 = vmatpush2.bf16.msra.mxu0 %v742
        %780 = vmatprep.subr.bf16.mxu0 0
        %781 = vmatpush2.bf16.msra.mxu0 %v741
        %782 = vmatprep.subr.bf16.mxu0 0
        %783 = vmatpush2.bf16.msra.mxu0 %v740
        %784 = vmatprep.subr.bf16.mxu0 0
        %785 = vmatpush2.bf16.msra.mxu0 %v739
        %786 = vmatprep.subr.bf16.mxu0 0
        %787 = vmatpush2.bf16.msra.mxu0 %v738
        %788 = vmatprep.subr.bf16.mxu0 0
        %789 = vmatpush2.bf16.msra.mxu0 %v737
        %790 = vmatprep.subr.bf16.mxu0 0
        %791 = vmatpush2.bf16.msra.mxu0 %v736
        %792 = vmatprep.mubr.bf16.mxu0 %v649
        %793 = vmatmul.mubr.bf16.gmra.mxu0 %v648
        %v794 = vpop.f32.mrf.mxu0
        %v795 = vadd.f32 %v622, %v794
        %v796 = vpop.f32.mrf.mxu0
        %v797 = vpop.f32.mrf.mxu0
        %v798 = vadd.f32 %v622, %v797
        %v799 = vpop.f32.mrf.mxu0
        %800 = vmatprep.mubr.bf16.mxu0 %v651
        %801 = vmatmul.mubr.bf16.gmra.mxu0 %v650
        %v802 = vpop.f32.mrf.mxu0
        %v803 = vadd.f32 %v622, %v802
        %v804 = vpop.f32.mrf.mxu0
        %v805 = vpop.f32.mrf.mxu0
        %v806 = vadd.f32 %v622, %v805
        %v807 = vpop.f32.mrf.mxu0
        %808 = vmatprep.mubr.bf16.mxu0 %v653
        %809 = vmatmul.mubr.bf16.gmra.mxu0 %v652
        %v810 = vpop.f32.mrf.mxu0
        %v811 = vadd.f32 %v622, %v810
        %v812 = vpop.f32.mrf.mxu0
        %v813 = vpop.f32.mrf.mxu0
        %v814 = vadd.f32 %v622, %v813
        %v815 = vpop.f32.mrf.mxu0
        %816 = vmatprep.mubr.bf16.mxu0 %v655
        %817 = vmatmul.mubr.bf16.gmra.mxu0 %v654
        %v818 = vpop.f32.mrf.mxu0
        %v819 = vadd.f32 %v622, %v818
        %v820 = vpop.f32.mrf.mxu0
        %v821 = vpop.f32.mrf.mxu0
        %v822 = vadd.f32 %v622, %v821
        %v823 = vpop.f32.mrf.mxu0
        %824 = vdwg.mxu0
        %p825 = scmp.lt.s32.totalorder %s20, 2
        // Predicated region
        $region53: #{graphsage_forward.1} parent=51 // pred_check
          %p826 = pneg %p825
        $region54: #{graphsage_forward.1} parent=51 // pred_check_branch
          %828 = sbr.rel (%p826) target = $region56
        $region55: #{graphsage_forward.1} parent=51 // pred_region
          %v829 = vmax.f32 %v795, 0.0
          %v830 = vmax.f32 %v798, 0.0
          %v831 = vmax.f32 %v803, 0.0
          %v832 = vmax.f32 %v806, 0.0
          %v833 = vmax.f32 %v811, 0.0
          %v834 = vmax.f32 %v814, 0.0
          %v835 = vmax.f32 %v819, 0.0
          %v836 = vmax.f32 %v822, 0.0
          %v837 = vpack.c.bf16 %v830, %v829
          %v838 = vpack.c.bf16 %v832, %v831
          %v839 = vpack.c.bf16 %v834, %v833
          %v840 = vpack.c.bf16 %v836, %v835
          %v845 = vunpack.c.l.b16 %v837
          %v846 = vunpack.c.h.b16 %v837
          %v847 = vunpack.c.l.b16 %v838
          %v848 = vunpack.c.h.b16 %v838
          %v849 = vunpack.c.l.b16 %v839
          %v850 = vunpack.c.h.b16 %v839
          %v851 = vunpack.c.l.b16 %v840
          %v852 = vunpack.c.h.b16 %v840
          %v853 = vpack.c.b16 %v845, %v845
          %v854 = vpack.c.b16 %v846, %v846
          %v855 = vpack.c.b16 %v847, %v847
          %v856 = vpack.c.b16 %v848, %v848
          %v857 = vpack.c.b16 %v849, %v849
          %v858 = vpack.c.b16 %v850, %v850
          %v859 = vpack.c.b16 %v851, %v851
          %v860 = vpack.c.b16 %v852, %v852
          %869 = vst [vmem:[#allocation2] sm:$0xf] %v853
          %870 = vst [vmem:[#allocation2 + $0x4] sm:$0xf] %v854
          %871 = vst [vmem:[#allocation2 + $0x8] sm:$0xf] %v855
          %872 = vst [vmem:[#allocation2 + $0xc] sm:$0xf] %v856
          %873 = vst [vmem:[#allocation2 + $0x10] sm:$0xf] %v857
          %874 = vst [vmem:[#allocation2 + $0x14] sm:$0xf] %v858
          %875 = vst [vmem:[#allocation2 + $0x18] sm:$0xf] %v859
          %876 = vst [vmem:[#allocation2 + $0x1c] sm:$0xf] %v860
        $region56: #{graphsage_forward.1} parent=51 // pred_fallthru
          _
        %p877 = scmp.eq.s32.totalorder %s20, 2
        // Predicated region
        $region57: #{graphsage_forward.1} parent=51 // pred_check
          %p878 = pneg %p877
        $region58: #{graphsage_forward.1} parent=51 // pred_check_branch
          %880 = sbr.rel (%p878) target = $region60
        $region59: #{graphsage_forward.1} parent=51 // pred_region
          %v881 = vlaneseq
          %v882 = vand.u32 %v881, 127
          %vm883 = vcmp.lt.s32.totalorder %v882, 8
          %v884 = vsel %vm883, %v795, -1e+30
          %v885 = vsel %vm883, %v798, -1e+30
          %v886 = vsel %vm883, %v803, -1e+30
          %v887 = vsel %vm883, %v806, -1e+30
          %v888 = vsel %vm883, %v811, -1e+30
          %v889 = vsel %vm883, %v814, -1e+30
          %v890 = vsel %vm883, %v819, -1e+30
          %v891 = vsel %vm883, %v822, -1e+30
          %892 = vmax.xlane.f32.xlu0 %v884
          %v893 = vpop.xlane.xlu0 %892
          %894 = vmax.xlane.f32.xlu0 %v885
          %v895 = vpop.xlane.xlu0 %894
          %896 = vmax.xlane.f32.xlu0 %v886
          %v897 = vpop.xlane.xlu0 %896
          %898 = vmax.xlane.f32.xlu0 %v887
          %v899 = vpop.xlane.xlu0 %898
          %900 = vmax.xlane.f32.xlu0 %v888
          %v901 = vpop.xlane.xlu0 %900
          %902 = vmax.xlane.f32.xlu0 %v889
          %v903 = vpop.xlane.xlu0 %902
          %904 = vmax.xlane.f32.xlu0 %v890
          %v905 = vpop.xlane.xlu0 %904
          %906 = vmax.xlane.f32.xlu0 %v891
          %v907 = vpop.xlane.xlu0 %906
          %v908 = vsub.f32 %v884, %v893
          %v909 = vsub.f32 %v885, %v895
          %v910 = vsub.f32 %v886, %v897
          %v911 = vsub.f32 %v887, %v899
          %v912 = vsub.f32 %v888, %v901
          %v913 = vsub.f32 %v889, %v903
          %v914 = vsub.f32 %v890, %v905
          %v915 = vsub.f32 %v891, %v907
          %v916 = vmul.f32 %v908, 1.442695
          %v917 = vpow.pop %v916
          %v918 = vmul.f32 %v909, 1.442695
          %v919 = vpow.pop %v918
          %v920 = vmul.f32 %v910, 1.442695
          %v921 = vpow.pop %v920
          %v922 = vmul.f32 %v911, 1.442695
          %v923 = vpow.pop %v922
          %v924 = vmul.f32 %v912, 1.442695
          %v925 = vpow.pop %v924
          %v926 = vmul.f32 %v913, 1.442695
          %v927 = vpow.pop %v926
          %v928 = vmul.f32 %v914, 1.442695
          %v929 = vpow.pop %v928
          %v930 = vmul.f32 %v915, 1.442695
          %v931 = vpow.pop %v930
          %v932 = vsel %vm883, %v917, 0.0
          %v933 = vsel %vm883, %v919, 0.0
          %v934 = vsel %vm883, %v921, 0.0
          %v935 = vsel %vm883, %v923, 0.0
          %v936 = vsel %vm883, %v925, 0.0
          %v937 = vsel %vm883, %v927, 0.0
          %v938 = vsel %vm883, %v929, 0.0
          %v939 = vsel %vm883, %v931, 0.0
          %940 = vadd.xlane.f32.xlu0 %v932
          %v941 = vpop.xlane.xlu0 %940
          %942 = vadd.xlane.f32.xlu0 %v933
          %v943 = vpop.xlane.xlu0 %942
          %944 = vadd.xlane.f32.xlu0 %v934
          %v945 = vpop.xlane.xlu0 %944
          %946 = vadd.xlane.f32.xlu0 %v935
          %v947 = vpop.xlane.xlu0 %946
          %948 = vadd.xlane.f32.xlu0 %v936
          %v949 = vpop.xlane.xlu0 %948
          %950 = vadd.xlane.f32.xlu0 %v937
          %v951 = vpop.xlane.xlu0 %950
          %952 = vadd.xlane.f32.xlu0 %v938
          %v953 = vpop.xlane.xlu0 %952
          %954 = vadd.xlane.f32.xlu0 %v939
          %v955 = vpop.xlane.xlu0 %954
          %v956 = vlog2.pop %v941
          %v957 = vmul.f32 %v956, 0.6931472
          %v958 = vlog2.pop %v943
          %v959 = vmul.f32 %v958, 0.6931472
          %v960 = vlog2.pop %v945
          %v961 = vmul.f32 %v960, 0.6931472
          %v962 = vlog2.pop %v947
          %v963 = vmul.f32 %v962, 0.6931472
          %v964 = vlog2.pop %v949
          %v965 = vmul.f32 %v964, 0.6931472
          %v966 = vlog2.pop %v951
          %v967 = vmul.f32 %v966, 0.6931472
          %v968 = vlog2.pop %v953
          %v969 = vmul.f32 %v968, 0.6931472
          %v970 = vlog2.pop %v955
          %v971 = vmul.f32 %v970, 0.6931472
          %v972 = vsub.f32 %v908, %v957
          %v973 = vsub.f32 %v909, %v959
          %v974 = vsub.f32 %v910, %v961
          %v975 = vsub.f32 %v911, %v963
          %v976 = vsub.f32 %v912, %v965
          %v977 = vsub.f32 %v913, %v967
          %v978 = vsub.f32 %v914, %v969
          %v979 = vsub.f32 %v915, %v971
          %v980 = vsel %vm883, %v972, 0.0
          %v981 = vsel %vm883, %v973, 0.0
          %v982 = vsel %vm883, %v974, 0.0
          %v983 = vsel %vm883, %v975, 0.0
          %v984 = vsel %vm883, %v976, 0.0
          %v985 = vsel %vm883, %v977, 0.0
          %v986 = vsel %vm883, %v978, 0.0
          %v987 = vsel %vm883, %v979, 0.0
          %988 = vst [vmem:[%s5] sm:$0xff] %v980
          %989 = vst [vmem:[%s5 + $0x8] sm:$0xff] %v981
          %990 = vst [vmem:[%s5 + $0x10] sm:$0xff] %v982
          %991 = vst [vmem:[%s5 + $0x18] sm:$0xff] %v983
          %992 = vst [vmem:[%s5 + $0x20] sm:$0xff] %v984
          %993 = vst [vmem:[%s5 + $0x28] sm:$0xff] %v985
          %994 = vst [vmem:[%s5 + $0x30] sm:$0xff] %v986
          %995 = vst [vmem:[%s5 + $0x38] sm:$0xff] %v987
        $region60: #{graphsage_forward.1} parent=51 // pred_fallthru
          _
      $region52: #{graphsage_forward.1} parent=39 // pred_fallthru
        _
      // Predicated region
      $region61: #{graphsage_forward.1} parent=39 // pred_check
        %p996 = pneg %p161
      $region62: #{graphsage_forward.1} parent=39 // pred_check_branch
        %998 = sbr.rel (%p996) target = $region64
      $region63: #{graphsage_forward.1} parent=39 // pred_region
        _
      $region64: #{graphsage_forward.1} parent=39 // pred_fallthru
        _
      // Predicated region
      $region65: #{graphsage_forward.1} parent=39 // pred_check
        %p999 = pneg %p161
      $region66: #{graphsage_forward.1} parent=39 // pred_check_branch
        %1001 = sbr.rel (%p999) target = $region68
      $region67: #{graphsage_forward.1} parent=39 // pred_region
        _
      $region68: #{graphsage_forward.1} parent=39 // pred_fallthru
        _
    $region40: #{graphsage_forward.1} parent=5 // pred_fallthru
      _
    %p1002 = scmp.le.s32.totalorder 2, %s11
    // Predicated region
    $region69: #{graphsage_forward.1} parent=5 // pred_check
      %p1003 = pneg %p1002
    $region70: #{graphsage_forward.1} parent=5 // pred_check_branch
      %1005 = sbr.rel (%p1003) target = $region72
    $region71: #{graphsage_forward.1} parent=5 // pred_region
      %s1006 = ssub.s32 %s11, 2
    $region72: #{graphsage_forward.1} parent=5 // pred_fallthru
      _
  $region6: #{graphsage_forward.1} parent=0 // loop_footer
    %s15 = sadd.s32 1, %s11
  $region7: #{graphsage_forward.1} parent=0 // loop_footer_branch
    %10 = sbr.rel target = $region3
  $region8: #{graphsage_forward.1} parent=0 // loop_exit
    _

</llo_original>
